<compile_context>
chip_gen: v6e
topology: v6e:2x2x1
jax: 0.10.0
libtpu: 0.0.40
codegen_flags: <defaults>
</compile_context>

<pallas_src>
import functools

import jax
import jax.numpy as jnp
from jax.experimental import pallas as pl
from jax.experimental.pallas import tpu as pltpu

LANE = 128     # TPU lane width (last dim granularity)
SUBLANE = 8    # TPU sublane granularity (second-to-last dim)


def _round_up(x, m):
    return (x + m - 1) // m * m


def _policy_kernel(x_ref, w1_ref, b1_ref, w2_ref, b2_ref, wh_ref, bh_ref,
                   out_ref, *, action_dim, log_std_min, log_std_max):
    """One batch tile of the full MLP + fused mean/log_std head."""
    # state streamed at natural width; cast to the weights' dtype in VMEM so
    # the MXU runs its native (bf16 when requested) path
    x = x_ref[...].astype(w1_ref.dtype)

    # hidden layer 1: ReLU(x @ W1 + b1)   (f32 accumulate, f32 bias/ReLU)
    h1 = jnp.dot(x, w1_ref[...], preferred_element_type=jnp.float32) + b1_ref[...]
    h1 = jnp.maximum(h1, 0.0)

    # hidden layer 2: ReLU(h1 @ W2 + b2)
    h2 = jnp.dot(h1.astype(w2_ref.dtype), w2_ref[...],
                 preferred_element_type=jnp.float32) + b2_ref[...]
    h2 = jnp.maximum(h2, 0.0)

    # fused head: one matmul produces [mean | log_std | zero-pad] lanes
    head = jnp.dot(h2.astype(wh_ref.dtype), wh_ref[...],
                   preferred_element_type=jnp.float32) + bh_ref[...]

    # clamp only the log_std lanes [A, 2A); mean lanes pass through untouched.
    # (1, HEADp) iota row -> jnp.where broadcasts it over the batch tile.
    col = jax.lax.broadcasted_iota(jnp.int32, (1, head.shape[-1]), 1)
    is_log_std = (col >= action_dim) & (col < 2 * action_dim)
    clamped = jnp.clip(head, log_std_min, log_std_max)
    out_ref[...] = jnp.where(is_log_std, clamped, head).astype(out_ref.dtype)


def init_params(key, state_dim, action_dim, hidden_sizes=(32, 32)):
    """Deterministic PyTorch-style (uniform +-1/sqrt(fan_in)) initialization.

    Weights are stored as (in_features, out_features), biases as (1, out)."""
    dims = [state_dim, *hidden_sizes]
    params = {}
    keys = jax.random.split(key, 8)

    def lin(kw, kb, fan_in, fan_out):
        bound = 1.0 / jnp.sqrt(float(fan_in))
        w = jax.random.uniform(kw, (fan_in, fan_out), jnp.float32, -bound, bound)
        b = jax.random.uniform(kb, (1, fan_out), jnp.float32, -bound, bound)
        return w, b

    params["W1"], params["b1"] = lin(keys[0], keys[1], dims[0], dims[1])
    params["W2"], params["b2"] = lin(keys[2], keys[3], dims[1], dims[2])
    params["Wm"], params["bm"] = lin(keys[4], keys[5], dims[2], action_dim)
    params["Ws"], params["bs"] = lin(keys[6], keys[7], dims[2], action_dim)
    return params


def pack_params(params, *, param_dtype=jnp.float32):
    """Fuse the two heads and zero-pad *output* feature dims to 128 lanes.

    The state feature dim (W1 rows) is left unpadded: the state is streamed
    at its natural width and the matmul just uses a small K. Zero padding of
    the hidden/head lanes is inert (ReLU(0)=0, padded lanes feed zero weight
    rows, padded head lanes are sliced off in the wrapper).
    For v6e/v7x/v5e MXU throughput pass param_dtype=jnp.bfloat16 (f32
    accumulation is preserved via preferred_element_type in the kernel);
    biases stay f32 so elementwise stays f32 (v5e VPU has no bf16).
    NOTE: if hidden sizes grow beyond 128, pad to 256 for v6e/v7x (2x256^2
    MXU); for the current widths 128 is the right granularity."""
    S, H1 = params["W1"].shape
    H2 = params["W2"].shape[1]
    A = params["Wm"].shape[1]

    H1p = _round_up(H1, LANE)
    H2p = _round_up(H2, LANE)
    HEADp = _round_up(2 * A, LANE)

    def pad2(x, r, c):
        return jnp.pad(x, ((0, r - x.shape[0]), (0, c - x.shape[1])))

    wh = jnp.concatenate([params["Wm"], params["Ws"]], axis=1)   # (H2, 2A)
    bh = jnp.concatenate([params["bm"], params["bs"]], axis=1)   # (1, 2A)

    packed = {
        "W1": pad2(params["W1"], S, H1p).astype(param_dtype),    # rows unpadded
        "b1": pad2(params["b1"], 1, H1p).astype(jnp.float32),
        "W2": pad2(params["W2"], H1p, H2p).astype(param_dtype),
        "b2": pad2(params["b2"], 1, H2p).astype(jnp.float32),
        "Wh": pad2(wh, H2p, HEADp).astype(param_dtype),
        "bh": pad2(bh, 1, HEADp).astype(jnp.float32),
    }
    return packed


def gaussian_policy_forward(state, packed, *, action_dim,
                            log_std_min=-20.0, log_std_max=2.0,
                            batch_tile=128, out_dtype=jnp.float32):
    """Pallas forward pass. state: (B, state_dim) float32.

    Returns (mean, log_std), each (B, action_dim) float32."""
    B, S = state.shape
    assert packed["W1"].shape[0] == S, "state_dim mismatch with packed params"
    H1p = packed["W1"].shape[1]
    H2p = packed["W2"].shape[1]
    HEADp = packed["Wh"].shape[1]

    # Batch tile: for small B a single grid step (TB = round_up(B, 8));
    # capped at batch_tile (default 128) so live f32 activations fit the
    # vreg file — larger batches then give a multi-step "parallel" grid
    # (software-pipelined, and shardable across v7x's two TensorCores).
    TB = min(_round_up(B, SUBLANE), _round_up(batch_tile, SUBLANE))
    Bp = _round_up(B, TB)
    grid = (Bp // TB,)

    # only the batch dim is padded (feature dim streams at natural width);
    # padded rows are sliced off after the call.
    x = state if Bp == B else jnp.pad(state, ((0, Bp - B), (0, 0)))

    kernel = functools.partial(
        _policy_kernel,
        action_dim=action_dim,
        log_std_min=float(log_std_min),
        log_std_max=float(log_std_max),
    )

    flops = 2 * Bp * (S * H1p + H1p * H2p + H2p * HEADp)
    bytes_accessed = (
        int(x.size) * x.dtype.itemsize
        + sum(int(p.size) * p.dtype.itemsize for p in packed.values())
        + Bp * HEADp * jnp.dtype(out_dtype).itemsize
    )

    out = pl.pallas_call(
        kernel,
        out_shape=jax.ShapeDtypeStruct((Bp, HEADp), out_dtype),
        grid=grid,
        in_specs=[
            pl.BlockSpec((TB, S), lambda i: (i, 0)),       # state: tiled batch,
            pl.BlockSpec((S, H1p), lambda i: (0, 0)),      #   natural feature width
            pl.BlockSpec((1, H1p), lambda i: (0, 0)),      # weights/biases stay
            pl.BlockSpec((H1p, H2p), lambda i: (0, 0)),    # VMEM-resident across
            pl.BlockSpec((1, H2p), lambda i: (0, 0)),      # grid steps
            pl.BlockSpec((H2p, HEADp), lambda i: (0, 0)),
            pl.BlockSpec((1, HEADp), lambda i: (0, 0)),
        ],
        out_specs=pl.BlockSpec((TB, HEADp), lambda i: (i, 0)),
        compiler_params=pltpu.CompilerParams(
            dimension_semantics=("parallel",),
        ),
        cost_estimate=pl.CostEstimate(
            flops=flops, transcendentals=0, bytes_accessed=bytes_accessed),
    )(x, packed["W1"], packed["b1"], packed["W2"], packed["b2"],
      packed["Wh"], packed["bh"])

    mean = out[:B, :action_dim].astype(jnp.float32)
    log_std = out[:B, action_dim:2 * action_dim].astype(jnp.float32)
    return mean, log_std


def reference_forward(state, params):
    """Pure-JAX reference of GaussianPolicy.forward (unpadded params)."""
    h1 = jnp.maximum(state @ params["W1"] + params["b1"], 0.0)
    h2 = jnp.maximum(h1 @ params["W2"] + params["b2"], 0.0)
    mean = h2 @ params["Wm"] + params["bm"]
    log_std = jnp.clip(h2 @ params["Ws"] + params["bs"], -20.0, 2.0)
    return mean, log_std


if __name__ == "__main__":
    key = jax.random.PRNGKey(0)
    k_state, k_params, k_state2 = jax.random.split(key, 3)

    state_dim = 16
    action_dim = 8
    hidden_sizes = (32, 32)
    raw_params = init_params(k_params, state_dim, action_dim, hidden_sizes)

    # --- f32 path, small batch: single grid step (TB = round_up(48, 8)) ---
    batch = 48
    state = jax.random.normal(k_state, (batch, state_dim), dtype=jnp.float32)
    packed_f32 = pack_params(raw_params, param_dtype=jnp.float32)
    mean, log_std = gaussian_policy_forward(
        state, packed_f32, action_dim=action_dim)
    jax.block_until_ready((mean, log_std))

    mean_ref, log_std_ref = reference_forward(state, raw_params)
    assert mean.shape == (batch, action_dim)
    assert log_std.shape == (batch, action_dim)
    assert jnp.allclose(mean, mean_ref, atol=1e-4, rtol=1e-4)
    assert jnp.allclose(log_std, log_std_ref, atol=1e-4, rtol=1e-4)

    # --- bf16 path, larger batch: multi-step parallel grid + bf16 output ---
    batch2 = 320
    state2 = jax.random.normal(k_state2, (batch2, state_dim), dtype=jnp.float32)
    packed_bf16 = pack_params(raw_params, param_dtype=jnp.bfloat16)
    mean2, log_std2 = gaussian_policy_forward(
        state2, packed_bf16, action_dim=action_dim,
        batch_tile=128, out_dtype=jnp.bfloat16)
    jax.block_until_ready((mean2, log_std2))

    mean2_ref, log_std2_ref = reference_forward(state2, raw_params)
    assert mean2.shape == (batch2, action_dim)
    assert log_std2.shape == (batch2, action_dim)
    assert jnp.allclose(mean2, mean2_ref, atol=5e-2, rtol=5e-2)
    assert jnp.allclose(log_std2, log_std2_ref, atol=5e-2, rtol=5e-2)

    # TODO(synk): sample()/get_log_prob() (tanh-squashed Normal sampling) are
    # intentionally left to plain JAX on top of (mean, log_std).

    print("KERNEL_OK")
</pallas_src>

<mosaic_0001>
module attributes {stable_mosaic.version = 11 : i64} {
  func.func @_policy_kernel(%arg0: i32, %arg1: memref<48x16xf32, #tpu.memory_space<vmem>>, %arg2: memref<16x128xf32, #tpu.memory_space<vmem>>, %arg3: memref<1x128xf32, #tpu.memory_space<vmem>>, %arg4: memref<128x128xf32, #tpu.memory_space<vmem>>, %arg5: memref<1x128xf32, #tpu.memory_space<vmem>>, %arg6: memref<128x128xf32, #tpu.memory_space<vmem>>, %arg7: memref<1x128xf32, #tpu.memory_space<vmem>>, %arg8: memref<48x128xf32, #tpu.memory_space<vmem>>) attributes {dimension_semantics = [#tpu.dimension_semantics<parallel>], iteration_bounds = array<i64: 1>, scalar_prefetch = 0 : i64, scratch_operands = 0 : i64, tpu.core_type = #tpu.core_type<tc>, window_params = [{transform_indices = @transform_0, window_bounds = array<i64: 48, 16>}, {pipeline_mode = #tpu.pipeline_mode<synchronous>, transform_indices = @transform_1, window_bounds = array<i64: 16, 128>}, {pipeline_mode = #tpu.pipeline_mode<synchronous>, transform_indices = @transform_2, window_bounds = array<i64: 1, 128>}, {pipeline_mode = #tpu.pipeline_mode<synchronous>, transform_indices = @transform_3, window_bounds = array<i64: 128, 128>}, {pipeline_mode = #tpu.pipeline_mode<synchronous>, transform_indices = @transform_4, window_bounds = array<i64: 1, 128>}, {pipeline_mode = #tpu.pipeline_mode<synchronous>, transform_indices = @transform_5, window_bounds = array<i64: 128, 128>}, {pipeline_mode = #tpu.pipeline_mode<synchronous>, transform_indices = @transform_6, window_bounds = array<i64: 1, 128>}, {transform_indices = @transform_7, window_bounds = array<i64: 48, 128>}]} {
    %c0 = arith.constant 0 : index
    %c0_0 = arith.constant 0 : index
    %0 = vector.load %arg1[%c0, %c0_0] : memref<48x16xf32, #tpu.memory_space<vmem>>, vector<48x16xf32>
    %c0_1 = arith.constant 0 : index
    %c0_2 = arith.constant 0 : index
    %1 = vector.load %arg2[%c0_1, %c0_2] : memref<16x128xf32, #tpu.memory_space<vmem>>, vector<16x128xf32>
    %cst = arith.constant dense<0.000000e+00> : vector<48x128xf32>
    %2 = tpu.matmul %0, %1, %cst {dimension_numbers = #tpu.dot_dimension_numbers<[1], [0], [0], [1], [0, 0, 1, 1], [], []>} : vector<48x16xf32>, vector<16x128xf32>, vector<48x128xf32> -> vector<48x128xf32>
    %c0_3 = arith.constant 0 : index
    %c0_4 = arith.constant 0 : index
    %3 = vector.load %arg3[%c0_3, %c0_4] : memref<1x128xf32, #tpu.memory_space<vmem>>, vector<1x128xf32>
    %4 = vector.broadcast %3 : vector<1x128xf32> to vector<48x128xf32>
    %5 = arith.addf %2, %4 : vector<48x128xf32>
    %cst_5 = arith.constant 0.000000e+00 : f32
    %6 = vector.broadcast %cst_5 : f32 to vector<48x128xf32>
    %7 = arith.maximumf %5, %6 : vector<48x128xf32>
    %c0_6 = arith.constant 0 : index
    %c0_7 = arith.constant 0 : index
    %8 = vector.load %arg4[%c0_6, %c0_7] : memref<128x128xf32, #tpu.memory_space<vmem>>, vector<128x128xf32>
    %cst_8 = arith.constant dense<0.000000e+00> : vector<48x128xf32>
    %9 = tpu.matmul %7, %8, %cst_8 {dimension_numbers = #tpu.dot_dimension_numbers<[1], [0], [0], [1], [0, 0, 1, 1], [], []>} : vector<48x128xf32>, vector<128x128xf32>, vector<48x128xf32> -> vector<48x128xf32>
    %c0_9 = arith.constant 0 : index
    %c0_10 = arith.constant 0 : index
    %10 = vector.load %arg5[%c0_9, %c0_10] : memref<1x128xf32, #tpu.memory_space<vmem>>, vector<1x128xf32>
    %11 = vector.broadcast %10 : vector<1x128xf32> to vector<48x128xf32>
    %12 = arith.addf %9, %11 : vector<48x128xf32>
    %cst_11 = arith.constant 0.000000e+00 : f32
    %13 = vector.broadcast %cst_11 : f32 to vector<48x128xf32>
    %14 = arith.maximumf %12, %13 : vector<48x128xf32>
    %c0_12 = arith.constant 0 : index
    %c0_13 = arith.constant 0 : index
    %15 = vector.load %arg6[%c0_12, %c0_13] : memref<128x128xf32, #tpu.memory_space<vmem>>, vector<128x128xf32>
    %cst_14 = arith.constant dense<0.000000e+00> : vector<48x128xf32>
    %16 = tpu.matmul %14, %15, %cst_14 {dimension_numbers = #tpu.dot_dimension_numbers<[1], [0], [0], [1], [0, 0, 1, 1], [], []>} : vector<48x128xf32>, vector<128x128xf32>, vector<48x128xf32> -> vector<48x128xf32>
    %c0_15 = arith.constant 0 : index
    %c0_16 = arith.constant 0 : index
    %17 = vector.load %arg7[%c0_15, %c0_16] : memref<1x128xf32, #tpu.memory_space<vmem>>, vector<1x128xf32>
    %18 = vector.broadcast %17 : vector<1x128xf32> to vector<48x128xf32>
    %19 = arith.addf %16, %18 : vector<48x128xf32>
    %20 = tpu.iota {dimensions = array<i32: 1>} : vector<1x128xi32>
    %c8_i32 = arith.constant 8 : i32
    %21 = vector.broadcast %c8_i32 : i32 to vector<1x128xi32>
    %22 = arith.cmpi sge, %20, %21 : vector<1x128xi32>
    %c16_i32 = arith.constant 16 : i32
    %23 = vector.broadcast %c16_i32 : i32 to vector<1x128xi32>
    %24 = arith.cmpi slt, %20, %23 : vector<1x128xi32>
    %25 = arith.andi %22, %24 : vector<1x128xi1>
    %cst_17 = arith.constant -2.000000e+01 : f32
    %cst_18 = arith.constant 2.000000e+00 : f32
    %26 = vector.broadcast %cst_17 : f32 to vector<48x128xf32>
    %27 = arith.maximumf %26, %19 : vector<48x128xf32>
    %28 = vector.broadcast %cst_18 : f32 to vector<48x128xf32>
    %29 = arith.minimumf %28, %27 : vector<48x128xf32>
    %30 = vector.shape_cast %25 : vector<1x128xi1> to vector<1x128xi1>
    %31 = vector.broadcast %30 : vector<1x128xi1> to vector<48x128xi1>
    %32 = arith.select %31, %29, %19 : vector<48x128xi1>, vector<48x128xf32>
    %c0_19 = arith.constant 0 : index
    %c0_20 = arith.constant 0 : index
    %33 = vector.load %arg8[%c0_19, %c0_20] : memref<48x128xf32, #tpu.memory_space<vmem>>, vector<48x128xf32>
    tpu.vector_store %arg8[%c0_19, %c0_20], %32 {strides = array<i32>} : memref<48x128xf32, #tpu.memory_space<vmem>>, vector<48x128xf32>,
    return
  }
  func.func @transform_0(%arg0: i32) -> (i32, i32) {
    %c0_i32 = arith.constant 0 : i32
    %c0_i32_0 = arith.constant 0 : i32
    return %arg0, %c0_i32 : i32, i32
  }
  func.func @transform_1(%arg0: i32) -> (i32, i32) {
    %c0_i32 = arith.constant 0 : i32
    %c0_i32_0 = arith.constant 0 : i32
    %c0_i32_1 = arith.constant 0 : i32
    return %c0_i32, %c0_i32_0 : i32, i32
  }
  func.func @transform_2(%arg0: i32) -> (i32, i32) {
    %c0_i32 = arith.constant 0 : i32
    %c0_i32_0 = arith.constant 0 : i32
    %c0_i32_1 = arith.constant 0 : i32
    return %c0_i32, %c0_i32_0 : i32, i32
  }
  func.func @transform_3(%arg0: i32) -> (i32, i32) {
    %c0_i32 = arith.constant 0 : i32
    %c0_i32_0 = arith.constant 0 : i32
    %c0_i32_1 = arith.constant 0 : i32
    return %c0_i32, %c0_i32_0 : i32, i32
  }
  func.func @transform_4(%arg0: i32) -> (i32, i32) {
    %c0_i32 = arith.constant 0 : i32
    %c0_i32_0 = arith.constant 0 : i32
    %c0_i32_1 = arith.constant 0 : i32
    return %c0_i32, %c0_i32_0 : i32, i32
  }
  func.func @transform_5(%arg0: i32) -> (i32, i32) {
    %c0_i32 = arith.constant 0 : i32
    %c0_i32_0 = arith.constant 0 : i32
    %c0_i32_1 = arith.constant 0 : i32
    return %c0_i32, %c0_i32_0 : i32, i32
  }
  func.func @transform_6(%arg0: i32) -> (i32, i32) {
    %c0_i32 = arith.constant 0 : i32
    %c0_i32_0 = arith.constant 0 : i32
    %c0_i32_1 = arith.constant 0 : i32
    return %c0_i32, %c0_i32_0 : i32, i32
  }
  func.func @transform_7(%arg0: i32) -> (i32, i32) {
    %c0_i32 = arith.constant 0 : i32
    %c0_i32_0 = arith.constant 0 : i32
    return %arg0, %c0_i32 : i32, i32
  }
}

</mosaic_0001>

<llo_original>
// kernel: tpu_custom_call.1
$region0: #{tpu_custom_call.1}
  #allocation0 [shape = 'u32[]', space=smem, size = 0x4, offset = 0x4, fixed_abs, tag = 'smem constant byte address 0x4 - core index']
  #allocation1 [shape = 'u32[144,128]{1,0:T(1,128)}', space=vmem, size = 0x12000, scoped, tag = 'internal scratch']
  %s0 = inlined_call_operand.vmem [shape: f32[48,16], index: 0, kind: input, shape index: {}]
  %s1 = inlined_call_operand.vmem [shape: f32[16,128], index: 1, kind: input, shape index: {}]
  %s2 = inlined_call_operand.vmem [shape: f32[1,128], index: 2, kind: input, shape index: {}]
  %s3 = inlined_call_operand.hbm [shape: f32[128,128], index: 3, kind: input, shape index: {}]
  %s4 = inlined_call_operand.vmem [shape: f32[1,128], index: 4, kind: input, shape index: {}]
  %s5 = inlined_call_operand.hbm [shape: f32[128,128], index: 5, kind: input, shape index: {}]
  %s6 = inlined_call_operand.vmem [shape: f32[1,128], index: 6, kind: input, shape index: {}]
  %s7 = inlined_call_operand.hbm [shape: f32[48,128], index: 7, kind: output, shape index: {}]
  %s8 = sld [smem:[#allocation0]]
  $region46: #{tpu_custom_call.1} parent=0
    _
  %s10 = ssub.s32 1, %s8
  %s11 = scalar_select 0, %s10, %s8
  $region1: #{tpu_custom_call.1} parent=0
    #allocation2 [shape = 'u8[65536]{0}', space=vmem, size = 0x10000, scoped, tag = 'input window, operand 3, single buffered']
    #allocation3 [shape = 's32[1]{0}', space=sflag, size = 0x4, scoped, tag = 'scoped memory for tpu_custom_call.1']
    #allocation4 [shape = 's32[1]{0}', space=sflag, size = 0x4, scoped, tag = 'scoped memory for tpu_custom_call.1']
    #allocation5 [shape = 'u8[65536]{0}', space=vmem, size = 0x10000, scoped, tag = 'input window, operand 5, single buffered']
    #allocation6 [shape = 's32[1]{0}', space=sflag, size = 0x4, scoped, tag = 'scoped memory for tpu_custom_call.1']
    #allocation7 [shape = 'u8[24576]{0}', space=vmem, size = 0x6000, scoped, tag = 'output window, operand 0, single buffered']
    %12 = vsyncpa [#allocation3], 0
    %13 = vsyncpa [#allocation6], 0
    %14 = vsyncpa [#allocation4], 0
    // Predicated region
    $region2: #{tpu_custom_call.1} parent=1 // pred_check
      _
    $region3: #{tpu_custom_call.1} parent=1 // pred_check_branch
      %16 = sbr.rel (0) target = $region5
    $region4: #{tpu_custom_call.1} parent=1 // pred_region
      _
    $region5: #{tpu_custom_call.1} parent=1 // pred_fallthru
      _
    // Predicated region
    $region6: #{tpu_custom_call.1} parent=1 // pred_check
      _
    $region7: #{tpu_custom_call.1} parent=1 // pred_check_branch
      %18 = sbr.rel (0) target = $region9
    $region8: #{tpu_custom_call.1} parent=1 // pred_region
      _
    $region9: #{tpu_custom_call.1} parent=1 // pred_fallthru
      _
    // Predicated region
    $region10: #{tpu_custom_call.1} parent=1 // pred_check
      _
    $region11: #{tpu_custom_call.1} parent=1 // pred_check_branch
      %20 = sbr.rel (0) target = $region13
    $region12: #{tpu_custom_call.1} parent=1 // pred_region
      _
    $region13: #{tpu_custom_call.1} parent=1 // pred_fallthru
      _
    // Predicated region
    $region14: #{tpu_custom_call.1} parent=1 // pred_check
      _
    $region15: #{tpu_custom_call.1} parent=1 // pred_check_branch
      %22 = sbr.rel (0) target = $region17
    $region16: #{tpu_custom_call.1} parent=1 // pred_region
      %s24 = ssub.s32 2048, 2048
      %25 = vsyncadd [#allocation3], %s24
      %s26 = sshll.u32 [#allocation2], 4
      %s27 = int_to_ptr.vmem [resolvable:$true] %s26
      %32 = dma.hbm_to_vmem [thread:$0]  %s3, 2048, %s27, [#allocation3], 128, 128, 8
    $region17: #{tpu_custom_call.1} parent=1 // pred_fallthru
      _
    // Predicated region
    $region18: #{tpu_custom_call.1} parent=1 // pred_check
      _
    $region19: #{tpu_custom_call.1} parent=1 // pred_check_branch
      %34 = sbr.rel (0) target = $region21
    $region20: #{tpu_custom_call.1} parent=1 // pred_region
      _
    $region21: #{tpu_custom_call.1} parent=1 // pred_fallthru
      _
    // Predicated region
    $region22: #{tpu_custom_call.1} parent=1 // pred_check
      _
    $region23: #{tpu_custom_call.1} parent=1 // pred_check_branch
      %36 = sbr.rel (0) target = $region25
    $region24: #{tpu_custom_call.1} parent=1 // pred_region
      %s38 = ssub.s32 2048, 2048
      %39 = vsyncadd [#allocation6], %s38
      %s40 = sshll.u32 [#allocation5], 4
      %s41 = int_to_ptr.vmem [resolvable:$true] %s40
      %46 = dma.hbm_to_vmem [thread:$0]  %s5, 2048, %s41, [#allocation6], 128, 128, 8
    $region25: #{tpu_custom_call.1} parent=1 // pred_fallthru
      _
    // Predicated region
    $region26: #{tpu_custom_call.1} parent=1 // pred_check
      _
    $region27: #{tpu_custom_call.1} parent=1 // pred_check_branch
      %48 = sbr.rel (0) target = $region29
    $region28: #{tpu_custom_call.1} parent=1 // pred_region
      _
    $region29: #{tpu_custom_call.1} parent=1 // pred_fallthru
      _
    // Predicated region
    $region30: #{tpu_custom_call.1} parent=1 // pred_check
      _
    $region31: #{tpu_custom_call.1} parent=1 // pred_check_branch
      %50 = sbr.rel (0) target = $region33
    $region32: #{tpu_custom_call.1} parent=1 // pred_region
      %51 = dma.done [#allocation3], 2048
    $region33: #{tpu_custom_call.1} parent=1 // pred_fallthru
      _
    // Predicated region
    $region34: #{tpu_custom_call.1} parent=1 // pred_check
      _
    $region35: #{tpu_custom_call.1} parent=1 // pred_check_branch
      %53 = sbr.rel (0) target = $region37
    $region36: #{tpu_custom_call.1} parent=1 // pred_region
      %54 = dma.done [#allocation6], 2048
    $region37: #{tpu_custom_call.1} parent=1 // pred_fallthru
      _
    %v55 = vld [vmem:[%s0] sm:$0xff]
    %v56 = vld [vmem:[%s0 + $0x8] sm:$0xff]
    %v57 = vld [vmem:[%s0 + $0x10] sm:$0xff]
    %v58 = vld [vmem:[%s0 + $0x18] sm:$0xff]
    %v59 = vld [vmem:[%s0 + $0x20] sm:$0xff]
    %v60 = vld [vmem:[%s0 + $0x28] sm:$0xff]
    %v61 = vld [vmem:[%s1] sm:$0xff]
    %v62 = vld [vmem:[%s1 + $0x8] sm:$0xff]
    %v63 = vld [vmem:[%s2] sm:$0x1]
    %v65 = vlaneseq
    %v66 = vshrl.u32 %v65, 7
    %v67 = vsub.s32 0, %v66
    %v68 = vrot.slane %v63, %v67
    %vm70 = vcmask 130048
    %v72 = vsel %vm70, %v55, 0
    %v75 = vsel %vm70, %v56, 0
    %v78 = vsel %vm70, %v57, 0
    %v81 = vsel %vm70, %v58, 0
    %v84 = vsel %vm70, %v59, 0
    %v87 = vsel %vm70, %v60, 0
    %89 = vmatprep.subr.mxu0 0.0
    %90 = vmatpush1.msra.mxu0 0.0
    %91 = vmatprep.subr.mxu0 0.0
    %92 = vmatpush1.msra.mxu0 0.0
    %93 = vmatprep.subr.mxu0 0.0
    %94 = vmatpush1.msra.mxu0 0.0
    %95 = vmatprep.subr.mxu0 0.0
    %96 = vmatpush1.msra.mxu0 0.0
    %97 = vmatprep.subr.mxu0 0.0
    %98 = vmatpush1.msra.mxu0 0.0
    %99 = vmatprep.subr.mxu0 0.0
    %100 = vmatpush1.msra.mxu0 0.0
    %101 = vmatprep.subr.mxu0 0.0
    %102 = vmatpush1.msra.mxu0 0.0
    %103 = vmatprep.subr.mxu0 0.0
    %104 = vmatpush1.msra.mxu0 0.0
    %105 = vmatprep.subr.mxu0 0.0
    %106 = vmatpush1.msra.mxu0 0.0
    %107 = vmatprep.subr.mxu0 0.0
    %108 = vmatpush1.msra.mxu0 0.0
    %109 = vmatprep.subr.mxu0 0.0
    %110 = vmatpush1.msra.mxu0 0.0
    %111 = vmatprep.subr.mxu0 0.0
    %112 = vmatpush1.msra.mxu0 0.0
    %113 = vmatprep.subr.mxu0 0.0
    %114 = vmatpush1.msra.mxu0 0.0
    %115 = vmatprep.subr.mxu0 0.0
    %116 = vmatpush1.msra.mxu0 0.0
    %117 = vmatprep.subr.mxu0 0.0
    %118 = vmatpush1.msra.mxu0 %v62
    %119 = vmatprep.subr.mxu0 0.0
    %120 = vmatpush1.msra.mxu0 %v61
    %121 = vmatprep.subr.mxu0 0.0
    %122 = vmatpush2.msra.mxu0 0.0
    %123 = vmatprep.subr.mxu0 0.0
    %124 = vmatpush2.msra.mxu0 0.0
    %125 = vmatprep.subr.mxu0 0.0
    %126 = vmatpush2.msra.mxu0 0.0
    %127 = vmatprep.subr.mxu0 0.0
    %128 = vmatpush2.msra.mxu0 0.0
    %129 = vmatprep.subr.mxu0 0.0
    %130 = vmatpush2.msra.mxu0 0.0
    %131 = vmatprep.subr.mxu0 0.0
    %132 = vmatpush2.msra.mxu0 0.0
    %133 = vmatprep.subr.mxu0 0.0
    %134 = vmatpush2.msra.mxu0 0.0
    %135 = vmatprep.subr.mxu0 0.0
    %136 = vmatpush2.msra.mxu0 0.0
    %137 = vmatprep.subr.mxu0 0.0
    %138 = vmatpush2.msra.mxu0 0.0
    %139 = vmatprep.subr.mxu0 0.0
    %140 = vmatpush2.msra.mxu0 0.0
    %141 = vmatprep.subr.mxu0 0.0
    %142 = vmatpush2.msra.mxu0 0.0
    %143 = vmatprep.subr.mxu0 0.0
    %144 = vmatpush2.msra.mxu0 0.0
    %145 = vmatprep.subr.mxu0 0.0
    %146 = vmatpush2.msra.mxu0 0.0
    %147 = vmatprep.subr.mxu0 0.0
    %148 = vmatpush2.msra.mxu0 0.0
    %149 = vmatprep.subr.mxu0 0.0
    %150 = vmatpush2.msra.mxu0 0.0
    %151 = vmatprep.subr.mxu0 0.0
    %152 = vmatpush2.msra.mxu0 0.0
    %153 = vmatprep.mubr.f32.mxu0 0.0
    %154 = vmatmul.mubr.f32.gmra.mxu0 %v72
    %v155 = vpop.f32.mrf.mxu0
    %v156 = vadd.f32 %v68, %v155
    %v157 = vpop.f32.mrf.mxu0
    %158 = vmatprep.mubr.f32.mxu0 0.0
    %159 = vmatmul.mubr.f32.gmra.mxu0 %v75
    %v160 = vpop.f32.mrf.mxu0
    %v161 = vadd.f32 %v68, %v160
    %v162 = vpop.f32.mrf.mxu0
    %163 = vmatprep.mubr.f32.mxu0 0.0
    %164 = vmatmul.mubr.f32.gmra.mxu0 %v78
    %v165 = vpop.f32.mrf.mxu0
    %v166 = vadd.f32 %v68, %v165
    %v167 = vpop.f32.mrf.mxu0
    %168 = vmatprep.mubr.f32.mxu0 0.0
    %169 = vmatmul.mubr.f32.gmra.mxu0 %v81
    %v170 = vpop.f32.mrf.mxu0
    %v171 = vadd.f32 %v68, %v170
    %v172 = vpop.f32.mrf.mxu0
    %173 = vmatprep.mubr.f32.mxu0 0.0
    %174 = vmatmul.mubr.f32.gmra.mxu0 %v84
    %v175 = vpop.f32.mrf.mxu0
    %v176 = vadd.f32 %v68, %v175
    %v177 = vpop.f32.mrf.mxu0
    %178 = vmatprep.mubr.f32.mxu0 0.0
    %179 = vmatmul.mubr.f32.gmra.mxu0 %v87
    %v180 = vpop.f32.mrf.mxu0
    %v181 = vadd.f32 %v68, %v180
    %v182 = vpop.f32.mrf.mxu0
    %183 = vdwg.mxu0
    %v184 = vmax.f32 %v156, 0.0
    %v185 = vmax.f32 %v161, 0.0
    %v186 = vmax.f32 %v166, 0.0
    %v187 = vmax.f32 %v171, 0.0
    %v188 = vmax.f32 %v176, 0.0
    %v189 = vmax.f32 %v181, 0.0
    %v190 = vld [vmem:[#allocation2] sm:$0xff]
    %v191 = vld [vmem:[#allocation2 + $0x8] sm:$0xff]
    %v192 = vld [vmem:[#allocation2 + $0x10] sm:$0xff]
    %v193 = vld [vmem:[#allocation2 + $0x18] sm:$0xff]
    %v194 = vld [vmem:[#allocation2 + $0x20] sm:$0xff]
    %v195 = vld [vmem:[#allocation2 + $0x28] sm:$0xff]
    %v196 = vld [vmem:[#allocation2 + $0x30] sm:$0xff]
    %v197 = vld [vmem:[#allocation2 + $0x38] sm:$0xff]
    %v198 = vld [vmem:[#allocation2 + $0x40] sm:$0xff]
    %v199 = vld [vmem:[#allocation2 + $0x48] sm:$0xff]
    %v200 = vld [vmem:[#allocation2 + $0x50] sm:$0xff]
    %v201 = vld [vmem:[#allocation2 + $0x58] sm:$0xff]
    %v202 = vld [vmem:[#allocation2 + $0x60] sm:$0xff]
    %v203 = vld [vmem:[#allocation2 + $0x68] sm:$0xff]
    %v204 = vld [vmem:[#allocation2 + $0x70] sm:$0xff]
    %v205 = vld [vmem:[#allocation2 + $0x78] sm:$0xff]
    %v206 = vld [vmem:[%s4] sm:$0x1]
    %v208 = vlaneseq
    %v209 = vshrl.u32 %v208, 7
    %v210 = vsub.s32 0, %v209
    %v211 = vrot.slane %v206, %v210
    %213 = vmatprep.subr.mxu0 0.0
    %214 = vmatpush1.msra.mxu0 %v205
    %215 = vmatprep.subr.mxu0 0.0
    %216 = vmatpush1.msra.mxu0 %v204
    %217 = vmatprep.subr.mxu0 0.0
    %218 = vmatpush1.msra.mxu0 %v203
    %219 = vmatprep.subr.mxu0 0.0
    %220 = vmatpush1.msra.mxu0 %v202
    %221 = vmatprep.subr.mxu0 0.0
    %222 = vmatpush1.msra.mxu0 %v201
    %223 = vmatprep.subr.mxu0 0.0
    %224 = vmatpush1.msra.mxu0 %v200
    %225 = vmatprep.subr.mxu0 0.0
    %226 = vmatpush1.msra.mxu0 %v199
    %227 = vmatprep.subr.mxu0 0.0
    %228 = vmatpush1.msra.mxu0 %v198
    %229 = vmatprep.subr.mxu0 0.0
    %230 = vmatpush1.msra.mxu0 %v197
    %231 = vmatprep.subr.mxu0 0.0
    %232 = vmatpush1.msra.mxu0 %v196
    %233 = vmatprep.subr.mxu0 0.0
    %234 = vmatpush1.msra.mxu0 %v195
    %235 = vmatprep.subr.mxu0 0.0
    %236 = vmatpush1.msra.mxu0 %v194
    %237 = vmatprep.subr.mxu0 0.0
    %238 = vmatpush1.msra.mxu0 %v193
    %239 = vmatprep.subr.mxu0 0.0
    %240 = vmatpush1.msra.mxu0 %v192
    %241 = vmatprep.subr.mxu0 0.0
    %242 = vmatpush1.msra.mxu0 %v191
    %243 = vmatprep.subr.mxu0 0.0
    %244 = vmatpush1.msra.mxu0 %v190
    %245 = vmatprep.subr.mxu0 0.0
    %246 = vmatpush2.msra.mxu0 0.0
    %247 = vmatprep.subr.mxu0 0.0
    %248 = vmatpush2.msra.mxu0 0.0
    %249 = vmatprep.subr.mxu0 0.0
    %250 = vmatpush2.msra.mxu0 0.0
    %251 = vmatprep.subr.mxu0 0.0
    %252 = vmatpush2.msra.mxu0 0.0
    %253 = vmatprep.subr.mxu0 0.0
    %254 = vmatpush2.msra.mxu0 0.0
    %255 = vmatprep.subr.mxu0 0.0
    %256 = vmatpush2.msra.mxu0 0.0
    %257 = vmatprep.subr.mxu0 0.0
    %258 = vmatpush2.msra.mxu0 0.0
    %259 = vmatprep.subr.mxu0 0.0
    %260 = vmatpush2.msra.mxu0 0.0
    %261 = vmatprep.subr.mxu0 0.0
    %262 = vmatpush2.msra.mxu0 0.0
    %263 = vmatprep.subr.mxu0 0.0
    %264 = vmatpush2.msra.mxu0 0.0
    %265 = vmatprep.subr.mxu0 0.0
    %266 = vmatpush2.msra.mxu0 0.0
    %267 = vmatprep.subr.mxu0 0.0
    %268 = vmatpush2.msra.mxu0 0.0
    %269 = vmatprep.subr.mxu0 0.0
    %270 = vmatpush2.msra.mxu0 0.0
    %271 = vmatprep.subr.mxu0 0.0
    %272 = vmatpush2.msra.mxu0 0.0
    %273 = vmatprep.subr.mxu0 0.0
    %274 = vmatpush2.msra.mxu0 0.0
    %275 = vmatprep.subr.mxu0 0.0
    %276 = vmatpush2.msra.mxu0 0.0
    %277 = vmatprep.mubr.f32.mxu0 0.0
    %278 = vmatmul.mubr.f32.gmra.mxu0 %v184
    %v279 = vpop.f32.mrf.mxu0
    %v280 = vadd.f32 %v211, %v279
    %v281 = vpop.f32.mrf.mxu0
    %282 = vmatprep.mubr.f32.mxu0 0.0
    %283 = vmatmul.mubr.f32.gmra.mxu0 %v185
    %v284 = vpop.f32.mrf.mxu0
    %v285 = vadd.f32 %v211, %v284
    %v286 = vpop.f32.mrf.mxu0
    %287 = vmatprep.mubr.f32.mxu0 0.0
    %288 = vmatmul.mubr.f32.gmra.mxu0 %v186
    %v289 = vpop.f32.mrf.mxu0
    %v290 = vadd.f32 %v211, %v289
    %v291 = vpop.f32.mrf.mxu0
    %292 = vmatprep.mubr.f32.mxu0 0.0
    %293 = vmatmul.mubr.f32.gmra.mxu0 %v187
    %v294 = vpop.f32.mrf.mxu0
    %v295 = vadd.f32 %v211, %v294
    %v296 = vpop.f32.mrf.mxu0
    %297 = vmatprep.mubr.f32.mxu0 0.0
    %298 = vmatmul.mubr.f32.gmra.mxu0 %v188
    %v299 = vpop.f32.mrf.mxu0
    %v300 = vadd.f32 %v211, %v299
    %v301 = vpop.f32.mrf.mxu0
    %302 = vmatprep.mubr.f32.mxu0 0.0
    %303 = vmatmul.mubr.f32.gmra.mxu0 %v189
    %v304 = vpop.f32.mrf.mxu0
    %v305 = vadd.f32 %v211, %v304
    %v306 = vpop.f32.mrf.mxu0
    %307 = vdwg.mxu0
    %v308 = vmax.f32 %v280, 0.0
    %v309 = vmax.f32 %v285, 0.0
    %v310 = vmax.f32 %v290, 0.0
    %v311 = vmax.f32 %v295, 0.0
    %v312 = vmax.f32 %v300, 0.0
    %v313 = vmax.f32 %v305, 0.0
    %v314 = vld [vmem:[#allocation5] sm:$0xff]
    %v315 = vld [vmem:[#allocation5 + $0x8] sm:$0xff]
    %v316 = vld [vmem:[#allocation5 + $0x10] sm:$0xff]
    %v317 = vld [vmem:[#allocation5 + $0x18] sm:$0xff]
    %v318 = vld [vmem:[#allocation5 + $0x20] sm:$0xff]
    %v319 = vld [vmem:[#allocation5 + $0x28] sm:$0xff]
    %v320 = vld [vmem:[#allocation5 + $0x30] sm:$0xff]
    %v321 = vld [vmem:[#allocation5 + $0x38] sm:$0xff]
    %v322 = vld [vmem:[#allocation5 + $0x40] sm:$0xff]
    %v323 = vld [vmem:[#allocation5 + $0x48] sm:$0xff]
    %v324 = vld [vmem:[#allocation5 + $0x50] sm:$0xff]
    %v325 = vld [vmem:[#allocation5 + $0x58] sm:$0xff]
    %v326 = vld [vmem:[#allocation5 + $0x60] sm:$0xff]
    %v327 = vld [vmem:[#allocation5 + $0x68] sm:$0xff]
    %v328 = vld [vmem:[#allocation5 + $0x70] sm:$0xff]
    %v329 = vld [vmem:[#allocation5 + $0x78] sm:$0xff]
    %v330 = vld [vmem:[%s6] sm:$0x1]
    %v332 = vlaneseq
    %v333 = vshrl.u32 %v332, 7
    %v334 = vsub.s32 0, %v333
    %v335 = vrot.slane %v330, %v334
    %337 = vmatprep.subr.mxu0 0.0
    %338 = vmatpush1.msra.mxu0 %v329
    %339 = vmatprep.subr.mxu0 0.0
    %340 = vmatpush1.msra.mxu0 %v328
    %341 = vmatprep.subr.mxu0 0.0
    %342 = vmatpush1.msra.mxu0 %v327
    %343 = vmatprep.subr.mxu0 0.0
    %344 = vmatpush1.msra.mxu0 %v326
    %345 = vmatprep.subr.mxu0 0.0
    %346 = vmatpush1.msra.mxu0 %v325
    %347 = vmatprep.subr.mxu0 0.0
    %348 = vmatpush1.msra.mxu0 %v324
    %349 = vmatprep.subr.mxu0 0.0
    %350 = vmatpush1.msra.mxu0 %v323
    %351 = vmatprep.subr.mxu0 0.0
    %352 = vmatpush1.msra.mxu0 %v322
    %353 = vmatprep.subr.mxu0 0.0
    %354 = vmatpush1.msra.mxu0 %v321
    %355 = vmatprep.subr.mxu0 0.0
    %356 = vmatpush1.msra.mxu0 %v320
    %357 = vmatprep.subr.mxu0 0.0
    %358 = vmatpush1.msra.mxu0 %v319
    %359 = vmatprep.subr.mxu0 0.0
    %360 = vmatpush1.msra.mxu0 %v318
    %361 = vmatprep.subr.mxu0 0.0
    %362 = vmatpush1.msra.mxu0 %v317
    %363 = vmatprep.subr.mxu0 0.0
    %364 = vmatpush1.msra.mxu0 %v316
    %365 = vmatprep.subr.mxu0 0.0
    %366 = vmatpush1.msra.mxu0 %v315
    %367 = vmatprep.subr.mxu0 0.0
    %368 = vmatpush1.msra.mxu0 %v314
    %369 = vmatprep.subr.mxu0 0.0
    %370 = vmatpush2.msra.mxu0 0.0
    %371 = vmatprep.subr.mxu0 0.0
    %372 = vmatpush2.msra.mxu0 0.0
    %373 = vmatprep.subr.mxu0 0.0
    %374 = vmatpush2.msra.mxu0 0.0
    %375 = vmatprep.subr.mxu0 0.0
    %376 = vmatpush2.msra.mxu0 0.0
    %377 = vmatprep.subr.mxu0 0.0
    %378 = vmatpush2.msra.mxu0 0.0
    %379 = vmatprep.subr.mxu0 0.0
    %380 = vmatpush2.msra.mxu0 0.0
    %381 = vmatprep.subr.mxu0 0.0
    %382 = vmatpush2.msra.mxu0 0.0
    %383 = vmatprep.subr.mxu0 0.0
    %384 = vmatpush2.msra.mxu0 0.0
    %385 = vmatprep.subr.mxu0 0.0
    %386 = vmatpush2.msra.mxu0 0.0
    %387 = vmatprep.subr.mxu0 0.0
    %388 = vmatpush2.msra.mxu0 0.0
    %389 = vmatprep.subr.mxu0 0.0
    %390 = vmatpush2.msra.mxu0 0.0
    %391 = vmatprep.subr.mxu0 0.0
    %392 = vmatpush2.msra.mxu0 0.0
    %393 = vmatprep.subr.mxu0 0.0
    %394 = vmatpush2.msra.mxu0 0.0
    %395 = vmatprep.subr.mxu0 0.0
    %396 = vmatpush2.msra.mxu0 0.0
    %397 = vmatprep.subr.mxu0 0.0
    %398 = vmatpush2.msra.mxu0 0.0
    %399 = vmatprep.subr.mxu0 0.0
    %400 = vmatpush2.msra.mxu0 0.0
    %401 = vmatprep.mubr.f32.mxu0 0.0
    %402 = vmatmul.mubr.f32.gmra.mxu0 %v308
    %v403 = vpop.f32.mrf.mxu0
    %v404 = vadd.f32 %v335, %v403
    %v405 = vpop.f32.mrf.mxu0
    %406 = vmatprep.mubr.f32.mxu0 0.0
    %407 = vmatmul.mubr.f32.gmra.mxu0 %v309
    %v408 = vpop.f32.mrf.mxu0
    %v409 = vadd.f32 %v335, %v408
    %v410 = vpop.f32.mrf.mxu0
    %411 = vmatprep.mubr.f32.mxu0 0.0
    %412 = vmatmul.mubr.f32.gmra.mxu0 %v310
    %v413 = vpop.f32.mrf.mxu0
    %v414 = vadd.f32 %v335, %v413
    %v415 = vpop.f32.mrf.mxu0
    %416 = vmatprep.mubr.f32.mxu0 0.0
    %417 = vmatmul.mubr.f32.gmra.mxu0 %v311
    %v418 = vpop.f32.mrf.mxu0
    %v419 = vadd.f32 %v335, %v418
    %v420 = vpop.f32.mrf.mxu0
    %421 = vmatprep.mubr.f32.mxu0 0.0
    %422 = vmatmul.mubr.f32.gmra.mxu0 %v312
    %v423 = vpop.f32.mrf.mxu0
    %v424 = vadd.f32 %v335, %v423
    %v425 = vpop.f32.mrf.mxu0
    %426 = vmatprep.mubr.f32.mxu0 0.0
    %427 = vmatmul.mubr.f32.gmra.mxu0 %v313
    %v428 = vpop.f32.mrf.mxu0
    %v429 = vadd.f32 %v335, %v428
    %v430 = vpop.f32.mrf.mxu0
    %431 = vdwg.mxu0
    %v432 = vlaneseq
    %v433 = vand.u32 %v432, 127
    %vm434 = vcmp.ge.s32.totalorder %v433, 8
    %vm435 = vcmp.lt.s32.totalorder %v433, 16
    %vm436 = vmand %vm434, %vm435
    %v437 = vmax.f32 %v404, -20.0
    %v438 = vmax.f32 %v409, -20.0
    %v439 = vmax.f32 %v414, -20.0
    %v440 = vmax.f32 %v419, -20.0
    %v441 = vmax.f32 %v424, -20.0
    %v442 = vmax.f32 %v429, -20.0
    %v443 = vmin.f32 %v437, 2.0
    %v444 = vmin.f32 %v438, 2.0
    %v445 = vmin.f32 %v439, 2.0
    %v446 = vmin.f32 %v440, 2.0
    %v447 = vmin.f32 %v441, 2.0
    %v448 = vmin.f32 %v442, 2.0
    %v449 = vsel %vm436, 1, 0
    %vm450 = vcmp.eq.s32.totalorder %v449, 1
    %v451 = vsel %vm450, %v443, %v404
    %v452 = vsel %vm450, %v444, %v409
    %v453 = vsel %vm450, %v445, %v414
    %v454 = vsel %vm450, %v446, %v419
    %v455 = vsel %vm450, %v447, %v424
    %v456 = vsel %vm450, %v448, %v429
    %457 = vst [vmem:[#allocation7] sm:$0xff] %v451
    %458 = vst [vmem:[#allocation7 + $0x8] sm:$0xff] %v452
    %459 = vst [vmem:[#allocation7 + $0x10] sm:$0xff] %v453
    %460 = vst [vmem:[#allocation7 + $0x18] sm:$0xff] %v454
    %461 = vst [vmem:[#allocation7 + $0x20] sm:$0xff] %v455
    %462 = vst [vmem:[#allocation7 + $0x28] sm:$0xff] %v456
    // Predicated region
    $region38: #{tpu_custom_call.1} parent=1 // pred_check
      _
    $region39: #{tpu_custom_call.1} parent=1 // pred_check_branch
      %464 = sbr.rel (0) target = $region41
    $region40: #{tpu_custom_call.1} parent=1 // pred_region
      %s466 = ssub.s32 768, 768
      %467 = vsyncadd [#allocation4], %s466
      %s468 = sshll.u32 [#allocation7], 4
      %s469 = int_to_ptr.vmem [resolvable:$true] %s468
      %474 = dma.vmem_to_hbm [thread:$0]  %s469, 768, %s7, [#allocation4], 128, 128, 8
    $region41: #{tpu_custom_call.1} parent=1 // pred_fallthru
      _
    // Predicated region
    $region42: #{tpu_custom_call.1} parent=1 // pred_check
      _
    $region43: #{tpu_custom_call.1} parent=1 // pred_check_branch
      %476 = sbr.rel (0) target = $region45
    $region44: #{tpu_custom_call.1} parent=1 // pred_region
      %477 = dma.done [#allocation4], 768
    $region45: #{tpu_custom_call.1} parent=1 // pred_fallthru
      _
    %478 = vsyncpa [#allocation3], 1
    %479 = vsyncpa [#allocation6], 1
    %480 = vsyncpa [#allocation4], 1

</llo_original>
